<compile_context>
chip_gen: v7x
topology: tpu7x:2x2x1
jax: 0.10.0
libtpu: 0.0.40
codegen_flags: <defaults>
</compile_context>

<pallas_src>
import functools
import math

import jax
import jax.numpy as jnp
from jax import lax
from jax.experimental import pallas as pl
from jax.experimental.pallas import tpu as pltpu


def _flash_kernel(q_ref, k_ref, v_ref, o_ref, m_ref, l_ref, acc_ref, *, scale2):
    """One (head, q_block, k_block) step of online-softmax attention.

    q_ref: (C, Tq)   k_ref/v_ref: (C, Tk)   o_ref: (C, Tq)
    m_ref/l_ref: (1, Tq) f32   acc_ref: (C, Tq) f32
    """
    ki = pl.program_id(2)

    @pl.when(ki == 0)
    def _():
        m_ref[...] = jnp.full_like(m_ref, -jnp.inf)
        l_ref[...] = jnp.zeros_like(l_ref)
        acc_ref[...] = jnp.zeros_like(acc_ref)

    # Both scale factors folded onto q once per step (C*Tq VPU work, small).
    q = q_ref[...] * scale2            # (C, Tq)
    k = k_ref[...]                     # (C, Tk)
    v = v_ref[...]                     # (C, Tk)

    # s[sk, tq] = sum_c k[c, sk] * q[c, tq]  — contract over C, no explicit .T.
    # (Transposed-LHS contraction; MXU consumes it natively, no XLU vxpose.)
    s = lax.dot_general(
        k, q,
        dimension_numbers=(((0,), (0,)), ((), ())),
        preferred_element_type=jnp.float32)              # (Tk, Tq) f32

    # Online softmax over the key (sublane) axis; all stats are (1, Tq) row
    # vectors so they broadcast against (C, Tq) without cross-lane moves.
    m_prev = m_ref[...]
    m_new = jnp.maximum(m_prev, jnp.max(s, axis=0, keepdims=True))
    alpha = jnp.exp(m_prev - m_new)                      # (1, Tq)
    p = jnp.exp(s - m_new)                               # (Tk, Tq), unnormalised

    l_ref[...] = alpha * l_ref[...] + jnp.sum(p, axis=0, keepdims=True)

    # a[c, tq] += sum_sk v[c, sk] * p[sk, tq]  — plain matmul, no transpose.
    pv = lax.dot_general(
        v, p.astype(v.dtype),
        dimension_numbers=(((1,), (0,)), ((), ())),
        preferred_element_type=jnp.float32)              # (C, Tq) f32
    acc_ref[...] = alpha * acc_ref[...] + pv
    m_ref[...] = m_new

    @pl.when(ki == pl.num_programs(2) - 1)
    def _():
        inv_l = 1.0 / l_ref[...]       # exact reciprocal, only Tq values
        o_ref[...] = (acc_ref[...] * inv_l).astype(o_ref.dtype)


def _vmem_budget_bytes():
    """Generation-aware scoped-VMEM budget (leaves headroom under physical)."""
    cap = 128 << 20
    try:
        info = pltpu.get_tpu_info()
        cap = int(getattr(info, "vmem_capacity_bytes", cap))
    except Exception:
        pass
    # ~48 MiB on v7x (64 MiB physical), ~96-100 MiB on v5e/v6e (128 MiB).
    return min(cap * 3 // 4, 100 << 20)


def _step_vmem_bytes(ch, tq, tk, itemsize):
    """Estimate of per-step VMEM: pipeline double-buffers + scratch + live f32."""
    pipeline = 2 * itemsize * (2 * ch * tq + 2 * ch * tk)  # q,out + k,v blocks, x2 buffers
    scratch = 4 * (ch * tq + 2 * 8 * tq)                   # acc + (padded) m, l
    live = 4 * int(2.5 * tq * tk)                          # s, p and temporaries
    return pipeline + scratch + live


def _pick_tiles(ch, T, itemsize, budget_bytes):
    """Pick (Tq, Tk) tiles: as large and balanced as the VMEM budget allows."""
    if T % 128 != 0:
        # Small / ragged T: single untiled block (fine for small T).
        return T, T
    cands = [t for t in (2048, 1024, 512, 256, 128) if T % t == 0]
    pairs = sorted(
        ((tq, tk) for tq in cands for tk in cands),
        key=lambda p: (min(p), p[0] * p[1], p[0]),
        reverse=True)
    for tq, tk in pairs:
        if _step_vmem_bytes(ch, tq, tk, itemsize) <= budget_bytes:
            return tq, tk
    return 128, 128


def qkv_attention_legacy(qkv, n_heads, tile_q=None, tile_k=None):
    """qkv: [N, H*3*C, T] -> [N, H*C, T] (same semantics as QKVAttentionLegacy)."""
    bs, width, length = qkv.shape
    assert width % (3 * n_heads) == 0
    ch = width // (3 * n_heads)
    B = bs * n_heads
    T = length
    itemsize = jnp.dtype(qkv.dtype).itemsize

    # Copy-free reshape: [N, H*3*C, T] -> (B, 3, C, T); q/k/v selection happens
    # purely inside the BlockSpec index_maps (no strided HBM slices).
    qkv_r = qkv.reshape(B, 3, ch, T)

    scale2 = 1.0 / math.sqrt(ch)       # (ch ** -0.25) ** 2, folded into q once

    budget = _vmem_budget_bytes()
    tq, tk = _pick_tiles(ch, T, itemsize, budget)
    if tile_q is not None:
        tq = tile_q
    if tile_k is not None:
        tk = tile_k
    assert T % tq == 0 and T % tk == 0

    grid = (B, T // tq, T // tk)       # heads & q-blocks parallel, keys last

    kernel = functools.partial(_flash_kernel, scale2=scale2)

    in_specs = [
        pl.BlockSpec((None, None, ch, tq), lambda b, qi, ki: (b, 0, 0, qi)),  # q
        pl.BlockSpec((None, None, ch, tk), lambda b, qi, ki: (b, 1, 0, ki)),  # k
        pl.BlockSpec((None, None, ch, tk), lambda b, qi, ki: (b, 2, 0, ki)),  # v
    ]
    # Output block is constant across the key axis -> stays VMEM-resident.
    out_spec = pl.BlockSpec((None, ch, tq), lambda b, qi, ki: (b, 0, qi))

    cost = pl.CostEstimate(
        flops=4 * B * ch * T * T,            # two matmuls: 2 * (2*T*T*ch)
        transcendentals=B * T * T,           # exp per score
        bytes_accessed=4 * B * ch * T * itemsize)

    out = pl.pallas_call(
        kernel,
        out_shape=jax.ShapeDtypeStruct((B, ch, T), qkv.dtype),
        grid_spec=pltpu.PrefetchScalarGridSpec(
            num_scalar_prefetch=0,
            grid=grid,
            in_specs=in_specs,
            out_specs=out_spec,
            scratch_shapes=[
                pltpu.VMEM((1, tq), jnp.float32),    # m (running max)
                pltpu.VMEM((1, tq), jnp.float32),    # l (running denom)
                pltpu.VMEM((ch, tq), jnp.float32),   # acc (unnormalised PV)
            ],
        ),
        compiler_params=pltpu.CompilerParams(
            dimension_semantics=("parallel", "parallel", "arbitrary"),
            vmem_limit_bytes=int(budget)),
        cost_estimate=cost,
    )(qkv_r, qkv_r, qkv_r)

    return out.reshape(bs, n_heads * ch, T)


def _reference(qkv, n_heads):
    """Pure-JAX reference mirroring the PyTorch forward."""
    bs, width, length = qkv.shape
    ch = width // (3 * n_heads)
    B = bs * n_heads
    qkv_r = qkv.reshape(B, 3 * ch, length)
    q, k, v = qkv_r[:, :ch], qkv_r[:, ch:2 * ch], qkv_r[:, 2 * ch:]
    scale = 1.0 / math.sqrt(math.sqrt(ch))
    w = jnp.einsum('bct,bcs->bts', q * scale, k * scale)
    w = jax.nn.softmax(w.astype(jnp.float32), axis=-1).astype(w.dtype)
    a = jnp.einsum('bts,bcs->bct', w, v)
    return a.reshape(bs, -1, length)


if __name__ == "__main__":
    # Small shapes consistent with the module: N=2, heads=2, ch=8, T=16.
    N, H, CH, T = 2, 2, 8, 16
    key = jax.random.PRNGKey(0)
    qkv = jax.random.normal(key, (N, H * 3 * CH, T), dtype=jnp.float32)

    out = jax.block_until_ready(qkv_attention_legacy(qkv, n_heads=H))
    ref = _reference(qkv, n_heads=H)
    assert out.shape == (N, H * CH, T)
    err = float(jnp.max(jnp.abs(out - ref)))
    assert jnp.allclose(out, ref, atol=1e-4, rtol=1e-4), err

    # Exercise the flash path (multiple key blocks + online softmax): T=256,
    # forced 128-wide q/k tiles -> grid (B, 2, 2).
    N2, H2, CH2, T2 = 1, 2, 16, 256
    qkv2 = jax.random.normal(jax.random.PRNGKey(0),
                             (N2, H2 * 3 * CH2, T2), dtype=jnp.float32)
    out2 = jax.block_until_ready(
        qkv_attention_legacy(qkv2, n_heads=H2, tile_q=128, tile_k=128))
    ref2 = _reference(qkv2, n_heads=H2)
    err2 = float(jnp.max(jnp.abs(out2 - ref2)))
    assert jnp.allclose(out2, ref2, atol=1e-4, rtol=1e-4), err2

    print("KERNEL_OK")
</pallas_src>

<mosaic_0001>
module attributes {stable_mosaic.version = 11 : i64} {
  func.func @_flash_kernel(%arg0: i32, %arg1: i32, %arg2: i32, %arg3: memref<1x1x8x16xf32, #tpu.memory_space<vmem>>, %arg4: memref<1x1x8x16xf32, #tpu.memory_space<vmem>>, %arg5: memref<1x1x8x16xf32, #tpu.memory_space<vmem>>, %arg6: memref<1x8x16xf32, #tpu.memory_space<vmem>>, %arg7: memref<1x16xf32, #tpu.memory_space<vmem>>, %arg8: memref<1x16xf32, #tpu.memory_space<vmem>>, %arg9: memref<8x16xf32, #tpu.memory_space<vmem>>) attributes {dimension_semantics = [#tpu.dimension_semantics<parallel>, #tpu.dimension_semantics<parallel>, #tpu.dimension_semantics<arbitrary>], iteration_bounds = array<i64: 4, 1, 1>, scalar_prefetch = 0 : i64, scratch_operands = 3 : i64, tpu.core_type = #tpu.core_type<tc>, window_params = [{transform_indices = @transform_0, window_bounds = array<i64: 1, 1, 8, 16>}, {transform_indices = @transform_1, window_bounds = array<i64: 1, 1, 8, 16>}, {transform_indices = @transform_2, window_bounds = array<i64: 1, 1, 8, 16>}, {transform_indices = @transform_3, window_bounds = array<i64: 1, 8, 16>}]} {
    %c0_i32 = arith.constant 0 : i32
    %0 = arith.cmpi eq, %arg2, %c0_i32 : i32
    %1 = arith.extui %0 : i1 to i32
    %c0_i32_0 = arith.constant 0 : i32
    %2 = arith.cmpi ne, %1, %c0_i32_0 : i32
    scf.if %2 {
      %cst_30 = arith.constant 0xFF800000 : f32
      %37 = vector.broadcast %cst_30 : f32 to vector<1x16xf32>
      %c0_31 = arith.constant 0 : index
      %c0_32 = arith.constant 0 : index
      %38 = vector.load %arg7[%c0_31, %c0_32] : memref<1x16xf32, #tpu.memory_space<vmem>>, vector<1x16xf32>
      tpu.vector_store %arg7[%c0_31, %c0_32], %37 {strides = array<i32>} : memref<1x16xf32, #tpu.memory_space<vmem>>, vector<1x16xf32>,
      %cst_33 = arith.constant 0.000000e+00 : f32
      %39 = vector.broadcast %cst_33 : f32 to vector<1x16xf32>
      %c0_34 = arith.constant 0 : index
      %c0_35 = arith.constant 0 : index
      %40 = vector.load %arg8[%c0_34, %c0_35] : memref<1x16xf32, #tpu.memory_space<vmem>>, vector<1x16xf32>
      tpu.vector_store %arg8[%c0_34, %c0_35], %39 {strides = array<i32>} : memref<1x16xf32, #tpu.memory_space<vmem>>, vector<1x16xf32>,
      %cst_36 = arith.constant 0.000000e+00 : f32
      %41 = vector.broadcast %cst_36 : f32 to vector<8x16xf32>
      %c0_37 = arith.constant 0 : index
      %c0_38 = arith.constant 0 : index
      %42 = vector.load %arg9[%c0_37, %c0_38] : memref<8x16xf32, #tpu.memory_space<vmem>>, vector<8x16xf32>
      tpu.vector_store %arg9[%c0_37, %c0_38], %41 {strides = array<i32>} : memref<8x16xf32, #tpu.memory_space<vmem>>, vector<8x16xf32>,
    } else {
    }
    %c0 = arith.constant 0 : index
    %c0_1 = arith.constant 0 : index
    %c0_2 = arith.constant 0 : index
    %c0_3 = arith.constant 0 : index
    %3 = vector.load %arg3[%c0, %c0_1, %c0_2, %c0_3] : memref<1x1x8x16xf32, #tpu.memory_space<vmem>>, vector<1x1x8x16xf32>
    %4 = vector.shape_cast %3 : vector<1x1x8x16xf32> to vector<8x16xf32>
    %cst = arith.constant 0.353553385 : f32
    %5 = vector.broadcast %cst : f32 to vector<8x16xf32>
    %6 = arith.mulf %4, %5 : vector<8x16xf32>
    %c0_4 = arith.constant 0 : index
    %c0_5 = arith.constant 0 : index
    %c0_6 = arith.constant 0 : index
    %c0_7 = arith.constant 0 : index
    %7 = vector.load %arg4[%c0_4, %c0_5, %c0_6, %c0_7] : memref<1x1x8x16xf32, #tpu.memory_space<vmem>>, vector<1x1x8x16xf32>
    %8 = vector.shape_cast %7 : vector<1x1x8x16xf32> to vector<8x16xf32>
    %c0_8 = arith.constant 0 : index
    %c0_9 = arith.constant 0 : index
    %c0_10 = arith.constant 0 : index
    %c0_11 = arith.constant 0 : index
    %9 = vector.load %arg5[%c0_8, %c0_9, %c0_10, %c0_11] : memref<1x1x8x16xf32, #tpu.memory_space<vmem>>, vector<1x1x8x16xf32>
    %10 = vector.shape_cast %9 : vector<1x1x8x16xf32> to vector<8x16xf32>
    %cst_12 = arith.constant dense<0.000000e+00> : vector<16x16xf32>
    %11 = tpu.matmul %8, %6, %cst_12 {dimension_numbers = #tpu.dot_dimension_numbers<[0], [0], [1], [1], [0, 1, 1, 1], [], []>} : vector<8x16xf32>, vector<8x16xf32>, vector<16x16xf32> -> vector<16x16xf32>
    %c0_13 = arith.constant 0 : index
    %c0_14 = arith.constant 0 : index
    %12 = vector.load %arg7[%c0_13, %c0_14] : memref<1x16xf32, #tpu.memory_space<vmem>>, vector<1x16xf32>
    %cst_15 = arith.constant dense<0xFF800000> : vector<16xf32>
    %13 = vector.multi_reduction <maximumf>, %11, %cst_15 [0] : vector<16x16xf32> to vector<16xf32>
    %14 = vector.shape_cast %13 : vector<16xf32> to vector<1x16xf32>
    %15 = arith.maximumf %12, %14 : vector<1x16xf32>
    %16 = arith.subf %12, %15 : vector<1x16xf32>
    %17 = math.exp %16 : vector<1x16xf32>
    %18 = vector.broadcast %15 : vector<1x16xf32> to vector<16x16xf32>
    %19 = arith.subf %11, %18 : vector<16x16xf32>
    %20 = math.exp %19 : vector<16x16xf32>
    %c0_16 = arith.constant 0 : index
    %c0_17 = arith.constant 0 : index
    %21 = vector.load %arg8[%c0_16, %c0_17] : memref<1x16xf32, #tpu.memory_space<vmem>>, vector<1x16xf32>
    %22 = arith.mulf %17, %21 : vector<1x16xf32>
    %cst_18 = arith.constant dense<0.000000e+00> : vector<16xf32>
    %23 = vector.multi_reduction <add>, %20, %cst_18 [0] : vector<16x16xf32> to vector<16xf32>
    %24 = vector.shape_cast %23 : vector<16xf32> to vector<1x16xf32>
    %25 = arith.addf %22, %24 : vector<1x16xf32>
    %c0_19 = arith.constant 0 : index
    %c0_20 = arith.constant 0 : index
    %26 = vector.load %arg8[%c0_19, %c0_20] : memref<1x16xf32, #tpu.memory_space<vmem>>, vector<1x16xf32>
    tpu.vector_store %arg8[%c0_19, %c0_20], %25 {strides = array<i32>} : memref<1x16xf32, #tpu.memory_space<vmem>>, vector<1x16xf32>,
    %cst_21 = arith.constant dense<0.000000e+00> : vector<8x16xf32>
    %27 = tpu.matmul %10, %20, %cst_21 {dimension_numbers = #tpu.dot_dimension_numbers<[1], [0], [0], [1], [0, 0, 1, 1], [], []>} : vector<8x16xf32>, vector<16x16xf32>, vector<8x16xf32> -> vector<8x16xf32>
    %c0_22 = arith.constant 0 : index
    %c0_23 = arith.constant 0 : index
    %28 = vector.load %arg9[%c0_22, %c0_23] : memref<8x16xf32, #tpu.memory_space<vmem>>, vector<8x16xf32>
    %29 = vector.broadcast %17 : vector<1x16xf32> to vector<8x16xf32>
    %30 = arith.mulf %29, %28 : vector<8x16xf32>
    %31 = arith.addf %30, %27 : vector<8x16xf32>
    %c0_24 = arith.constant 0 : index
    %c0_25 = arith.constant 0 : index
    %32 = vector.load %arg9[%c0_24, %c0_25] : memref<8x16xf32, #tpu.memory_space<vmem>>, vector<8x16xf32>
    tpu.vector_store %arg9[%c0_24, %c0_25], %31 {strides = array<i32>} : memref<8x16xf32, #tpu.memory_space<vmem>>, vector<8x16xf32>,
    %c0_26 = arith.constant 0 : index
    %c0_27 = arith.constant 0 : index
    %33 = vector.load %arg7[%c0_26, %c0_27] : memref<1x16xf32, #tpu.memory_space<vmem>>, vector<1x16xf32>
    tpu.vector_store %arg7[%c0_26, %c0_27], %15 {strides = array<i32>} : memref<1x16xf32, #tpu.memory_space<vmem>>, vector<1x16xf32>,
    %c0_i32_28 = arith.constant 0 : i32
    %34 = arith.cmpi eq, %arg2, %c0_i32_28 : i32
    %35 = arith.extui %34 : i1 to i32
    %c0_i32_29 = arith.constant 0 : i32
    %36 = arith.cmpi ne, %35, %c0_i32_29 : i32
    scf.if %36 {
      %c0_30 = arith.constant 0 : index
      %c0_31 = arith.constant 0 : index
      %37 = vector.load %arg8[%c0_30, %c0_31] : memref<1x16xf32, #tpu.memory_space<vmem>>, vector<1x16xf32>
      %cst_32 = arith.constant 1.000000e+00 : f32
      %38 = vector.broadcast %cst_32 : f32 to vector<1x16xf32>
      %39 = arith.divf %38, %37 : vector<1x16xf32>
      %c0_33 = arith.constant 0 : index
      %c0_34 = arith.constant 0 : index
      %40 = vector.load %arg9[%c0_33, %c0_34] : memref<8x16xf32, #tpu.memory_space<vmem>>, vector<8x16xf32>
      %41 = vector.broadcast %39 : vector<1x16xf32> to vector<8x16xf32>
      %42 = arith.mulf %40, %41 : vector<8x16xf32>
      %c0_35 = arith.constant 0 : index
      %c0_36 = arith.constant 0 : index
      %c0_37 = arith.constant 0 : index
      %43 = vector.load %arg6[%c0_35, %c0_36, %c0_37] : memref<1x8x16xf32, #tpu.memory_space<vmem>>, vector<1x8x16xf32>
      %44 = vector.shape_cast %43 : vector<1x8x16xf32> to vector<8x16xf32>
      %45 = vector.shape_cast %42 : vector<8x16xf32> to vector<1x8x16xf32>
      tpu.vector_store %arg6[%c0_35, %c0_36, %c0_37], %45 {strides = array<i32>} : memref<1x8x16xf32, #tpu.memory_space<vmem>>, vector<1x8x16xf32>,
    } else {
    }
    return
  }
  func.func @transform_0(%arg0: i32, %arg1: i32, %arg2: i32) -> (i32, i32, i32, i32) {
    %c0_i32 = arith.constant 0 : i32
    %c0_i32_0 = arith.constant 0 : i32
    %c0_i32_1 = arith.constant 0 : i32
    return %arg0, %c0_i32, %c0_i32_0, %arg1 : i32, i32, i32, i32
  }
  func.func @transform_1(%arg0: i32, %arg1: i32, %arg2: i32) -> (i32, i32, i32, i32) {
    %c1_i32 = arith.constant 1 : i32
    %c0_i32 = arith.constant 0 : i32
    %c0_i32_0 = arith.constant 0 : i32
    return %arg0, %c1_i32, %c0_i32, %arg2 : i32, i32, i32, i32
  }
  func.func @transform_2(%arg0: i32, %arg1: i32, %arg2: i32) -> (i32, i32, i32, i32) {
    %c2_i32 = arith.constant 2 : i32
    %c0_i32 = arith.constant 0 : i32
    %c0_i32_0 = arith.constant 0 : i32
    return %arg0, %c2_i32, %c0_i32, %arg2 : i32, i32, i32, i32
  }
  func.func @transform_3(%arg0: i32, %arg1: i32, %arg2: i32) -> (i32, i32, i32) {
    %c0_i32 = arith.constant 0 : i32
    %c0_i32_0 = arith.constant 0 : i32
    return %arg0, %c0_i32, %arg1 : i32, i32, i32
  }
}

</mosaic_0001>

<llo_original>
// kernel: tpu_custom_call.1
$region0: #{tpu_custom_call.1}
  #allocation0 [shape = 'u32[]', space=smem, size = 0x4, offset = 0x4, fixed_abs, tag = 'smem constant byte address 0x4 - core index']
  #allocation1 [shape = 'u32[144,128]{1,0:T(1,128)}', space=vmem, size = 0x12000, scoped, tag = 'internal scratch']
  #allocation2 [shape = 'f32[1,16]{1,0:T(1,128)}', space=vmem, size = 0x200, scoped, tag = 'scratch operand']
  #allocation3 [shape = 'f32[1,16]{1,0:T(1,128)}', space=vmem, size = 0x200, scoped, tag = 'scratch operand']
  #allocation4 [shape = 'f32[8,16]{1,0:T(8,128)}', space=vmem, size = 0x1000, scoped, tag = 'scratch operand']
  %s0 = inlined_call_operand.hbm [shape: f32[4,3,8,16], index: 0, kind: input, shape index: {}]
  %s1 = inlined_call_operand.hbm [shape: f32[4,3,8,16], index: 1, kind: input, shape index: {}]
  %s2 = inlined_call_operand.hbm [shape: f32[4,3,8,16], index: 2, kind: input, shape index: {}]
  %s3 = inlined_call_operand.hbm [shape: f32[4,8,16], index: 3, kind: output, shape index: {}]
  %s4 = sld [smem:[#allocation0]]
  $region65: #{tpu_custom_call.1} parent=0
    _
  %s6 = ssub.s32 1, %s4
  %s7 = scalar_select 0, %s6, %s4
  $region1: #{tpu_custom_call.1} parent=0
    #allocation5 [shape = 'u8[8192]{0}', space=vmem, size = 0x2000, scoped, tag = 'input window, operand 0']
    #allocation6 [shape = 's32[2]{0}', space=sflag, size = 0x8, scoped, tag = 'scoped memory for tpu_custom_call.1']
    #allocation7 [shape = 's32[2]{0}', space=sflag, size = 0x8, scoped, tag = 'scoped memory for tpu_custom_call.1']
    #allocation8 [shape = 'u8[8192]{0}', space=vmem, size = 0x2000, scoped, tag = 'input window, operand 1']
    #allocation9 [shape = 's32[2]{0}', space=sflag, size = 0x8, scoped, tag = 'scoped memory for tpu_custom_call.1']
    #allocation10 [shape = 'u8[8192]{0}', space=vmem, size = 0x2000, scoped, tag = 'input window, operand 2']
    #allocation11 [shape = 'u8[8192]{0}', space=vmem, size = 0x2000, scoped, tag = 'output window, operand 0']
    %8 = vsyncpa [#allocation6], 0
    %s9 = scalar_lea.sflag [#allocation6], 1
    %10 = vsyncpa %s9, 0
    %11 = vsyncpa [#allocation9], 0
    %s12 = scalar_lea.sflag [#allocation9], 1
    %13 = vsyncpa %s12, 0
    %14 = vsyncpa [#allocation7], 0
    %s15 = scalar_lea.sflag [#allocation7], 1
    %16 = vsyncpa %s15, 0
    loop: start=0, step=1, limit=6
    $region2: #{tpu_custom_call.1} parent=1 // loop_pre_header
      _
    $region3: #{tpu_custom_call.1} parent=1 // loop_header
      %s18 = sphi 0, %s22
      %p19 = scmp.ge.s32.totalorder %s18, 6
      %s25 = sphi 0, %s44
      %s26 = sphi 0, %s40
      %s27 = sphi 0, %s36
      %s28 = sphi 0, %s25
      %s29 = sphi 0, %s26
      %s30 = sphi 0, %s27
      %s31 = sphi 0, %s28
      %s32 = sphi 0, %s29
      %s33 = sphi 0, %s30
      %s49 = sphi 0, %s51
      %s52 = sphi 0, %s49
      %s53 = sphi 0, %s52
      %s69 = sphi 0, %s53
      %s77 = sphi 0, %s79
      %s80 = sphi 0, %s77
      %s81 = sphi 0, %s80
      %s97 = sphi 0, %s81
      %s105 = sphi 0, %s107
      %s108 = sphi 0, %s105
      %s109 = sphi 0, %s108
      %s125 = sphi 0, %s109
      %s133 = sphi 0, %s135
      %s136 = sphi 0, %s133
      %s137 = sphi 0, %s136
      %s153 = sphi 0, %s137
    $region4: #{tpu_custom_call.1} parent=1 // loop_header_branch
      %21 = sbr.rel (%p19) target = $region8
    $region5: #{tpu_custom_call.1} parent=1 // loop_body
      %s23 = ssub.s32 %s18, 1
      %s24 = ssub.s32 %s18, 2
      %s34 = sadd.s32 1, %s27
      %p35 = scmp.ge.s32.totalorder %s34, 1
      %s36 = scalar_select %p35, 0, %s34
      %s37 = sadd.s32 1, %s26
      %s38 = scalar_select %p35, %s37, %s26
      %p39 = scmp.ge.s32.totalorder %s38, 1
      %s40 = scalar_select %p39, 0, %s38
      %s41 = sadd.s32 1, %s25
      %s42 = scalar_select %p39, %s41, %s25
      %p43 = scmp.ge.s32.totalorder %s42, 4
      %s44 = scalar_select %p43, 0, %s42
      %s45 = ssub.s32 %s25, %s44
      %s46 = ssub.s32 %s26, %s40
      %s47 = sor.u32 %s45, %s46
      %p48 = scmp.eq.s32.totalorder %s47, 0
      %s50 = sadd.s32 %s49, 1
      %s51 = scalar_select %p48, %s49, %s50
      %p54 = pneg %p48
      %p55 = scmp.eq.s32.totalorder %s18, 3
      %p56 = por %p54, %p55
      %p57 = scmp.ne.s32.totalorder %s49, %s52
      %p58 = scmp.eq.s32.totalorder %s18, 0
      %p59 = por %p57, %p58
      %p60 = scmp.ne.s32.totalorder %s49, %s52
      %p61 = scmp.eq.s32.totalorder %s23, 3
      %p62 = por %p60, %p61
      %p63 = scmp.ne.s32.totalorder %s52, %s53
      %p64 = scmp.eq.s32.totalorder %s23, 0
      %p65 = por %p63, %p64
      %p66 = scmp.ne.s32.totalorder %s52, %s53
      %p67 = scmp.eq.s32.totalorder %s24, 3
      %p68 = por %p66, %p67
      %p70 = scmp.ne.s32.totalorder %s53, %s69
      %p71 = scmp.eq.s32.totalorder %s24, 0
      %p72 = por %p70, %p71
      %s73 = ssub.s32 %s25, %s44
      %s74 = ssub.s32 %s27, %s36
      %s75 = sor.u32 %s73, %s74
      %p76 = scmp.eq.s32.totalorder %s75, 0
      %s78 = sadd.s32 %s77, 1
      %s79 = scalar_select %p76, %s77, %s78
      %p82 = pneg %p76
      %p83 = scmp.eq.s32.totalorder %s18, 3
      %p84 = por %p82, %p83
      %p85 = scmp.ne.s32.totalorder %s77, %s80
      %p86 = scmp.eq.s32.totalorder %s18, 0
      %p87 = por %p85, %p86
      %p88 = scmp.ne.s32.totalorder %s77, %s80
      %p89 = scmp.eq.s32.totalorder %s23, 3
      %p90 = por %p88, %p89
      %p91 = scmp.ne.s32.totalorder %s80, %s81
      %p92 = scmp.eq.s32.totalorder %s23, 0
      %p93 = por %p91, %p92
      %p94 = scmp.ne.s32.totalorder %s80, %s81
      %p95 = scmp.eq.s32.totalorder %s24, 3
      %p96 = por %p94, %p95
      %p98 = scmp.ne.s32.totalorder %s81, %s97
      %p99 = scmp.eq.s32.totalorder %s24, 0
      %p100 = por %p98, %p99
      %s101 = ssub.s32 %s25, %s44
      %s102 = ssub.s32 %s27, %s36
      %s103 = sor.u32 %s101, %s102
      %p104 = scmp.eq.s32.totalorder %s103, 0
      %s106 = sadd.s32 %s105, 1
      %s107 = scalar_select %p104, %s105, %s106
      %p110 = pneg %p104
      %p111 = scmp.eq.s32.totalorder %s18, 3
      %p112 = por %p110, %p111
      %p113 = scmp.ne.s32.totalorder %s105, %s108
      %p114 = scmp.eq.s32.totalorder %s18, 0
      %p115 = por %p113, %p114
      %p116 = scmp.ne.s32.totalorder %s105, %s108
      %p117 = scmp.eq.s32.totalorder %s23, 3
      %p118 = por %p116, %p117
      %p119 = scmp.ne.s32.totalorder %s108, %s109
      %p120 = scmp.eq.s32.totalorder %s23, 0
      %p121 = por %p119, %p120
      %p122 = scmp.ne.s32.totalorder %s108, %s109
      %p123 = scmp.eq.s32.totalorder %s24, 3
      %p124 = por %p122, %p123
      %p126 = scmp.ne.s32.totalorder %s109, %s125
      %p127 = scmp.eq.s32.totalorder %s24, 0
      %p128 = por %p126, %p127
      %s129 = ssub.s32 %s25, %s44
      %s130 = ssub.s32 %s26, %s40
      %s131 = sor.u32 %s129, %s130
      %p132 = scmp.eq.s32.totalorder %s131, 0
      %s134 = sadd.s32 %s133, 1
      %s135 = scalar_select %p132, %s133, %s134
      %p138 = pneg %p132
      %p139 = scmp.eq.s32.totalorder %s18, 3
      %p140 = por %p138, %p139
      %p141 = scmp.ne.s32.totalorder %s133, %s136
      %p142 = scmp.eq.s32.totalorder %s18, 0
      %p143 = por %p141, %p142
      %p144 = scmp.ne.s32.totalorder %s133, %s136
      %p145 = scmp.eq.s32.totalorder %s23, 3
      %p146 = por %p144, %p145
      %p147 = scmp.ne.s32.totalorder %s136, %s137
      %p148 = scmp.eq.s32.totalorder %s23, 0
      %p149 = por %p147, %p148
      %p150 = scmp.ne.s32.totalorder %s136, %s137
      %p151 = scmp.eq.s32.totalorder %s24, 3
      %p152 = por %p150, %p151
      %p154 = scmp.ne.s32.totalorder %s137, %s153
      %p155 = scmp.eq.s32.totalorder %s24, 0
      %p156 = por %p154, %p155
      %p157 = scmp.le.s32.totalorder 1, %s18
      %p158 = scmp.lt.s32.totalorder %s18, 5
      %p159 = pnand %p157, %p158
      %p160 = pneg %p159
      // Predicated region
      $region9: #{tpu_custom_call.1} parent=5 // pred_check
        _
      $region10: #{tpu_custom_call.1} parent=5 // pred_check_branch
        %162 = sbr.rel (%p159) target = $region12
      $region11: #{tpu_custom_call.1} parent=5 // pred_region
        %s163 = ssub.s32 %s18, 1
      $region12: #{tpu_custom_call.1} parent=5 // pred_fallthru
        _
      %p164 = scmp.lt.s32.totalorder %s18, 4
      // Predicated region
      $region13: #{tpu_custom_call.1} parent=5 // pred_check
        %p165 = pneg %p164
      $region14: #{tpu_custom_call.1} parent=5 // pred_check_branch
        %167 = sbr.rel (%p165) target = $region16
      $region15: #{tpu_custom_call.1} parent=5 // pred_region
        // Predicated region
        $region17: #{tpu_custom_call.1} parent=15 // pred_check
          %p168 = pneg %p59
        $region18: #{tpu_custom_call.1} parent=15 // pred_check_branch
          %170 = sbr.rel (%p168) target = $region20
        $region19: #{tpu_custom_call.1} parent=15 // pred_region
          %s171 = sand.u32 %s49, 1
          %s172 = scalar_lea.sflag [#allocation6], %s171
          %s173 = sand.u32 %s49, 1
          %s174 = smul.addr %s173, 8
          %s175 = scalar_lea.vmem [#allocation5], %s174
          %s177 = ssub.s32 128, 128
          %178 = vsyncadd %s172, %s177
          %s179 = smul.addr %s25, 3
          %s180 = sadd.s32 %s26, %s179
          %s181 = smul.addr %s180, 128
          %s182 = scalar_lea.hbm %s0, %s181
          %s184 = sshll.u32 %s175, 4
          %s185 = int_to_ptr.vmem [resolvable:$true] %s184
          %187 = dma.hbm_to_vmem [thread:$0]  %s182, 128, %s185, %s172
        $region20: #{tpu_custom_call.1} parent=15 // pred_fallthru
          _
        // Predicated region
        $region21: #{tpu_custom_call.1} parent=15 // pred_check
          %p188 = pneg %p87
        $region22: #{tpu_custom_call.1} parent=15 // pred_check_branch
          %190 = sbr.rel (%p188) target = $region24
        $region23: #{tpu_custom_call.1} parent=15 // pred_region
          %s191 = sand.u32 %s18, 1
          %s192 = scalar_lea.sflag [#allocation9], %s191
          %s193 = sand.u32 %s77, 1
          %s194 = smul.addr %s193, 8
          %s195 = scalar_lea.vmem [#allocation8], %s194
          %s197 = ssub.s32 128, 128
          %198 = vsyncadd %s192, %s197
          %s199 = sadd.s32 %s27, 1
          %s200 = smul.addr %s25, 3
          %s201 = sadd.s32 %s199, %s200
          %s202 = smul.addr %s201, 128
          %s203 = scalar_lea.hbm %s1, %s202
          %s205 = sshll.u32 %s195, 4
          %s206 = int_to_ptr.vmem [resolvable:$true] %s205
          %208 = dma.hbm_to_vmem [thread:$0]  %s203, 128, %s206, %s192
        $region24: #{tpu_custom_call.1} parent=15 // pred_fallthru
          _
        // Predicated region
        $region25: #{tpu_custom_call.1} parent=15 // pred_check
          %p209 = pneg %p115
        $region26: #{tpu_custom_call.1} parent=15 // pred_check_branch
          %211 = sbr.rel (%p209) target = $region28
        $region27: #{tpu_custom_call.1} parent=15 // pred_region
          %s212 = sand.u32 %s18, 1
          %s213 = scalar_lea.sflag [#allocation9], %s212
          %s214 = sand.u32 %s105, 1
          %s215 = smul.addr %s214, 8
          %s216 = scalar_lea.vmem [#allocation10], %s215
          %s218 = ssub.s32 128, 128
          %219 = vsyncadd %s213, %s218
          %s220 = sadd.s32 %s27, 2
          %s221 = smul.addr %s25, 3
          %s222 = sadd.s32 %s220, %s221
          %s223 = smul.addr %s222, 128
          %s224 = scalar_lea.hbm %s2, %s223
          %s226 = sshll.u32 %s216, 4
          %s227 = int_to_ptr.vmem [resolvable:$true] %s226
          %229 = dma.hbm_to_vmem [thread:$0]  %s224, 128, %s227, %s213
        $region28: #{tpu_custom_call.1} parent=15 // pred_fallthru
          _
      $region16: #{tpu_custom_call.1} parent=5 // pred_fallthru
        _
      %p230 = scmp.le.s32.totalorder 1, %s18
      %p231 = scmp.lt.s32.totalorder %s18, 5
      %p232 = pnand %p230, %p231
      %p233 = pneg %p232
      // Predicated region
      $region29: #{tpu_custom_call.1} parent=5 // pred_check
        _
      $region30: #{tpu_custom_call.1} parent=5 // pred_check_branch
        %235 = sbr.rel (%p232) target = $region32
      $region31: #{tpu_custom_call.1} parent=5 // pred_region
        %s236 = ssub.s32 %s18, 1
        %s237 = sand.u32 %s52, 1
        %s238 = scalar_lea.sflag [#allocation6], %s237
        %s239 = sand.u32 %s52, 1
        %s240 = smul.addr %s239, 8
        %s241 = scalar_lea.vmem [#allocation5], %s240
        // Predicated region
        $region33: #{tpu_custom_call.1} parent=31 // pred_check
          %p242 = pneg %p65
        $region34: #{tpu_custom_call.1} parent=31 // pred_check_branch
          %244 = sbr.rel (%p242) target = $region36
        $region35: #{tpu_custom_call.1} parent=31 // pred_region
          %245 = dma.done %s238, 128
        $region36: #{tpu_custom_call.1} parent=31 // pred_fallthru
          _
        %s246 = sand.u32 %s23, 1
        %s247 = scalar_lea.sflag [#allocation9], %s246
        %s248 = sand.u32 %s80, 1
        %s249 = smul.addr %s248, 8
        %s250 = scalar_lea.vmem [#allocation8], %s249
        // Predicated region
        $region37: #{tpu_custom_call.1} parent=31 // pred_check
          %p251 = pneg %p93
        $region38: #{tpu_custom_call.1} parent=31 // pred_check_branch
          %253 = sbr.rel (%p251) target = $region40
        $region39: #{tpu_custom_call.1} parent=31 // pred_region
          %254 = dma.done %s247, 128
        $region40: #{tpu_custom_call.1} parent=31 // pred_fallthru
          _
        %s255 = sand.u32 %s23, 1
        %s256 = scalar_lea.sflag [#allocation9], %s255
        %s257 = sand.u32 %s108, 1
        %s258 = smul.addr %s257, 8
        %s259 = scalar_lea.vmem [#allocation10], %s258
        // Predicated region
        $region41: #{tpu_custom_call.1} parent=31 // pred_check
          %p260 = pneg %p121
        $region42: #{tpu_custom_call.1} parent=31 // pred_check_branch
          %262 = sbr.rel (%p260) target = $region44
        $region43: #{tpu_custom_call.1} parent=31 // pred_region
          %263 = dma.done %s256, 128
        $region44: #{tpu_custom_call.1} parent=31 // pred_fallthru
          _
        %s264 = sand.u32 %s52, 1
        %s265 = scalar_lea.sflag [#allocation6], %s264
        %s266 = sand.u32 %s52, 1
        %s267 = smul.addr %s266, 8
        %s268 = scalar_lea.vmem [#allocation5], %s267
        %p269 = pneg %p65
        %p270 = pneg %p62
        %s271 = sand.u32 %s23, 1
        %s272 = scalar_lea.sflag [#allocation9], %s271
        %s273 = sand.u32 %s80, 1
        %s274 = smul.addr %s273, 8
        %s275 = scalar_lea.vmem [#allocation8], %s274
        %p276 = pneg %p93
        %p277 = pneg %p90
        %s278 = sand.u32 %s23, 1
        %s279 = scalar_lea.sflag [#allocation9], %s278
        %s280 = sand.u32 %s108, 1
        %s281 = smul.addr %s280, 8
        %s282 = scalar_lea.vmem [#allocation10], %s281
        %p283 = pneg %p121
        %p284 = pneg %p118
        %p285 = pneg %p149
        %p286 = pneg %p146
        %s287 = sand.u32 %s136, 1
        %s288 = scalar_lea.sflag [#allocation7], %s287
        %s289 = sand.u32 %s136, 1
        %s290 = smul.addr %s289, 8
        %s291 = scalar_lea.vmem [#allocation11], %s290
        %p292 = scmp.eq.s32.totalorder %s30, 0
        // Predicated region
        $region45: #{tpu_custom_call.1} parent=31 // pred_check
          %p293 = pneg %p292
        $region46: #{tpu_custom_call.1} parent=31 // pred_check_branch
          %295 = sbr.rel (%p293) target = $region48
        $region47: #{tpu_custom_call.1} parent=31 // pred_region
          %vm296 = vcmask 122880
          %297 = vst.msk [vmem:[#allocation2] sm:$0x1] %vm296, -inf
          %298 = vst.msk [vmem:[#allocation3] sm:$0x1] %vm296, 0.0
          %vm299 = vcmask 130048
          %300 = vst.msk [vmem:[#allocation4] sm:$0xff] %vm299, 0.0
        $region48: #{tpu_custom_call.1} parent=31 // pred_fallthru
          _
        %v301 = vld [vmem:[%s241] sm:$0xff]
        %v302 = vmul.f32 %v301, 0.35355338
        %v303 = vld [vmem:[%s250] sm:$0xff]
        %v304 = vld [vmem:[%s259] sm:$0xff]
        %305 = vxpose.xlu0.b32.start [1/16] %v303, 128
        %306 = vxpose.xlu0.b32.cont [2/16] 0.0, 128
        %307 = vxpose.xlu0.b32.cont [3/16] 0.0, 128
        %308 = vxpose.xlu0.b32.cont [4/16] 0.0, 128
        %309 = vxpose.xlu0.b32.cont [5/16] 0.0, 128
        %310 = vxpose.xlu0.b32.cont [6/16] 0.0, 128
        %311 = vxpose.xlu0.b32.cont [7/16] 0.0, 128
        %312 = vxpose.xlu0.b32.cont [8/16] 0.0, 128
        %313 = vxpose.xlu0.b32.cont [9/16] 0.0, 128
        %314 = vxpose.xlu0.b32.cont [10/16] 0.0, 128
        %315 = vxpose.xlu0.b32.cont [11/16] 0.0, 128
        %316 = vxpose.xlu0.b32.cont [12/16] 0.0, 128
        %317 = vxpose.xlu0.b32.cont [13/16] 0.0, 128
        %318 = vxpose.xlu0.b32.cont [14/16] 0.0, 128
        %319 = vxpose.xlu0.b32.cont [15/16] 0.0, 128
        %320 = vxpose.xlu0.b32.end [16/16] 0.0, 128
        %v321 = vpop.trf.xlu0
        %v322 = vpop.trf.xlu0
        %v323 = vpop.trf.xlu0
        %v324 = vpop.trf.xlu0
        %v325 = vpop.trf.xlu0
        %v326 = vpop.trf.xlu0
        %v327 = vpop.trf.xlu0
        %v328 = vpop.trf.xlu0
        %v329 = vpop.trf.xlu0
        %v330 = vpop.trf.xlu0
        %v331 = vpop.trf.xlu0
        %v332 = vpop.trf.xlu0
        %v333 = vpop.trf.xlu0
        %v334 = vpop.trf.xlu0
        %v335 = vpop.trf.xlu0
        %v336 = vpop.trf.xlu0
        %vm337 = vcmask 64512
        %v339 = vsel %vm337, %v321, 0
        %v342 = vsel %vm337, %v322, 0
        %344 = vmatprep.subr.mxu0 0.0
        %345 = vmatpush1.msra.mxu0 %v302
        %346 = vmatprep.subr.mxu0 0.0
        %347 = vmatpush1.msra.mxu0 0.0
        %348 = vmatprep.subr.mxu0 0.0
        %349 = vmatpush1.msra.mxu0 0.0
        %350 = vmatprep.subr.mxu0 0.0
        %351 = vmatpush1.msra.mxu0 0.0
        %352 = vmatprep.subr.mxu0 0.0
        %353 = vmatpush1.msra.mxu0 0.0
        %354 = vmatprep.subr.mxu0 0.0
        %355 = vmatpush1.msra.mxu0 0.0
        %356 = vmatprep.subr.mxu0 0.0
        %357 = vmatpush1.msra.mxu0 0.0
        %358 = vmatprep.subr.mxu0 0.0
        %359 = vmatpush1.msra.mxu0 0.0
        %360 = vmatprep.subr.mxu0 0.0
        %361 = vmatpush1.msra.mxu0 0.0
        %362 = vmatprep.subr.mxu0 0.0
        %363 = vmatpush1.msra.mxu0 0.0
        %364 = vmatprep.subr.mxu0 0.0
        %365 = vmatpush1.msra.mxu0 0.0
        %366 = vmatprep.subr.mxu0 0.0
        %367 = vmatpush1.msra.mxu0 0.0
        %368 = vmatprep.subr.mxu0 0.0
        %369 = vmatpush1.msra.mxu0 0.0
        %370 = vmatprep.subr.mxu0 0.0
        %371 = vmatpush1.msra.mxu0 0.0
        %372 = vmatprep.subr.mxu0 0.0
        %373 = vmatpush1.msra.mxu0 0.0
        %374 = vmatprep.subr.mxu0 0.0
        %375 = vmatpush1.msra.mxu0 0.0
        %376 = vmatprep.subr.mxu0 0.0
        %377 = vmatpush1.msra.mxu0 0.0
        %378 = vmatprep.subr.mxu0 0.0
        %379 = vmatpush1.msra.mxu0 0.0
        %380 = vmatprep.subr.mxu0 0.0
        %381 = vmatpush1.msra.mxu0 0.0
        %382 = vmatprep.subr.mxu0 0.0
        %383 = vmatpush1.msra.mxu0 0.0
        %384 = vmatprep.subr.mxu0 0.0
        %385 = vmatpush1.msra.mxu0 0.0
        %386 = vmatprep.subr.mxu0 0.0
        %387 = vmatpush1.msra.mxu0 0.0
        %388 = vmatprep.subr.mxu0 0.0
        %389 = vmatpush1.msra.mxu0 0.0
        %390 = vmatprep.subr.mxu0 0.0
        %391 = vmatpush1.msra.mxu0 0.0
        %392 = vmatprep.subr.mxu0 0.0
        %393 = vmatpush1.msra.mxu0 0.0
        %394 = vmatprep.subr.mxu0 0.0
        %395 = vmatpush1.msra.mxu0 0.0
        %396 = vmatprep.subr.mxu0 0.0
        %397 = vmatpush1.msra.mxu0 0.0
        %398 = vmatprep.subr.mxu0 0.0
        %399 = vmatpush1.msra.mxu0 0.0
        %400 = vmatprep.subr.mxu0 0.0
        %401 = vmatpush1.msra.mxu0 0.0
        %402 = vmatprep.subr.mxu0 0.0
        %403 = vmatpush1.msra.mxu0 0.0
        %404 = vmatprep.subr.mxu0 0.0
        %405 = vmatpush1.msra.mxu0 0.0
        %406 = vmatprep.subr.mxu0 0.0
        %407 = vmatpush1.msra.mxu0 0.0
        %408 = vmatprep.mubr.f32.mxu0 0.0
        %409 = vmatmul.mubr.f32.gmra.mrb[0].mxu0 %v339
        %v410 = vpop.f32.mrb[0].mxu0
        %v411 = vadd.f32 0.0, %v410
        %v412 = vpop.f32.mrb[0].mxu0
        %413 = vmatprep.mubr.f32.mxu0 0.0
        %414 = vmatmul.mubr.f32.gmra.mrb[0].mxu0 %v342
        %v415 = vpop.f32.mrb[0].mxu0
        %v416 = vadd.f32 0.0, %v415
        %v417 = vpop.f32.mrb[0].mxu0
        %418 = vdwg.mxu0
        %v419 = vld [vmem:[#allocation2] sm:$0x1]
        %vm420 = vcmask 130048
        %v421 = vsel %vm420, %v411, -inf
        %v422 = vsel %vm420, %v416, -inf
        %v423 = vmax.f32 %v421, %v422
        %v424 = vrot.slane %v423, 4
        %v425 = vmax.f32 %v423, %v424
        %v426 = vrot.slane %v425, 2
        %v427 = vmax.f32 %v425, %v426
        %v428 = vrot.slane %v427, 1
        %v429 = vmax.f32 %v427, %v428
        %v430 = vmax.f32 %v419, %v429
        %v431 = vsub.f32 %v419, %v430
        %v432 = vmul.f32 %v431, 1.442695
        %v433 = vpow.pop %v432
        %v435 = vlaneseq
        %v436 = vshrl.u32 %v435, 7
        %v437 = vsub.s32 0, %v436
        %v438 = vrot.slane %v430, %v437
        %v440 = vsub.f32 %v411, %v438
        %v441 = vsub.f32 %v416, %v438
        %v442 = vmul.f32 %v440, 1.442695
        %v443 = vpow.pop %v442
        %v444 = vmul.f32 %v441, 1.442695
        %v445 = vpow.pop %v444
        %v446 = vld [vmem:[#allocation3] sm:$0x1]
        %v447 = vmul.f32 %v433, %v446
        %v448 = vsel %vm420, %v443, 0.0
        %v449 = vsel %vm420, %v445, 0.0
        %v450 = vadd.f32 %v448, %v449
        %v451 = vrot.slane %v450, 4
        %v452 = vadd.f32 %v450, %v451
        %v453 = vrot.slane %v452, 2
        %v454 = vadd.f32 %v452, %v453
        %v455 = vrot.slane %v454, 1
        %v456 = vadd.f32 %v454, %v455
        %v457 = vadd.f32 %v447, %v456
        %vm458 = vcmask 122880
        %459 = vst.msk [vmem:[#allocation3] sm:$0x1] %vm458, %v457
        %v461 = vsel %vm420, %v304, 0
        %463 = vmatprep.subr.mxu0 0.0
        %464 = vmatpush1.msra.mxu0 %v443
        %465 = vmatprep.subr.mxu0 0.0
        %466 = vmatpush1.msra.mxu0 %v445
        %467 = vmatprep.subr.mxu0 0.0
        %468 = vmatpush1.msra.mxu0 0.0
        %469 = vmatprep.subr.mxu0 0.0
        %470 = vmatpush1.msra.mxu0 0.0
        %471 = vmatprep.subr.mxu0 0.0
        %472 = vmatpush1.msra.mxu0 0.0
        %473 = vmatprep.subr.mxu0 0.0
        %474 = vmatpush1.msra.mxu0 0.0
        %475 = vmatprep.subr.mxu0 0.0
        %476 = vmatpush1.msra.mxu0 0.0
        %477 = vmatprep.subr.mxu0 0.0
        %478 = vmatpush1.msra.mxu0 0.0
        %479 = vmatprep.subr.mxu0 0.0
        %480 = vmatpush1.msra.mxu0 0.0
        %481 = vmatprep.subr.mxu0 0.0
        %482 = vmatpush1.msra.mxu0 0.0
        %483 = vmatprep.subr.mxu0 0.0
        %484 = vmatpush1.msra.mxu0 0.0
        %485 = vmatprep.subr.mxu0 0.0
        %486 = vmatpush1.msra.mxu0 0.0
        %487 = vmatprep.subr.mxu0 0.0
        %488 = vmatpush1.msra.mxu0 0.0
        %489 = vmatprep.subr.mxu0 0.0
        %490 = vmatpush1.msra.mxu0 0.0
        %491 = vmatprep.subr.mxu0 0.0
        %492 = vmatpush1.msra.mxu0 0.0
        %493 = vmatprep.subr.mxu0 0.0
        %494 = vmatpush1.msra.mxu0 0.0
        %495 = vmatprep.subr.mxu0 0.0
        %496 = vmatpush1.msra.mxu0 0.0
        %497 = vmatprep.subr.mxu0 0.0
        %498 = vmatpush1.msra.mxu0 0.0
        %499 = vmatprep.subr.mxu0 0.0
        %500 = vmatpush1.msra.mxu0 0.0
        %501 = vmatprep.subr.mxu0 0.0
        %502 = vmatpush1.msra.mxu0 0.0
        %503 = vmatprep.subr.mxu0 0.0
        %504 = vmatpush1.msra.mxu0 0.0
        %505 = vmatprep.subr.mxu0 0.0
        %506 = vmatpush1.msra.mxu0 0.0
        %507 = vmatprep.subr.mxu0 0.0
        %508 = vmatpush1.msra.mxu0 0.0
        %509 = vmatprep.subr.mxu0 0.0
        %510 = vmatpush1.msra.mxu0 0.0
        %511 = vmatprep.subr.mxu0 0.0
        %512 = vmatpush1.msra.mxu0 0.0
        %513 = vmatprep.subr.mxu0 0.0
        %514 = vmatpush1.msra.mxu0 0.0
        %515 = vmatprep.subr.mxu0 0.0
        %516 = vmatpush1.msra.mxu0 0.0
        %517 = vmatprep.subr.mxu0 0.0
        %518 = vmatpush1.msra.mxu0 0.0
        %519 = vmatprep.subr.mxu0 0.0
        %520 = vmatpush1.msra.mxu0 0.0
        %521 = vmatprep.subr.mxu0 0.0
        %522 = vmatpush1.msra.mxu0 0.0
        %523 = vmatprep.subr.mxu0 0.0
        %524 = vmatpush1.msra.mxu0 0.0
        %525 = vmatprep.subr.mxu0 0.0
        %526 = vmatpush1.msra.mxu0 0.0
        %527 = vmatprep.mubr.f32.mxu0 0.0
        %528 = vmatmul.mubr.f32.gmra.mrb[0].mxu0 %v461
        %v529 = vpop.f32.mrb[0].mxu0
        %v530 = vadd.f32 0.0, %v529
        %v531 = vpop.f32.mrb[0].mxu0
        %532 = vdwg.mxu0
        %v533 = vld [vmem:[#allocation4] sm:$0xff]
        %v535 = vlaneseq
        %v536 = vshrl.u32 %v535, 7
        %v537 = vsub.s32 0, %v536
        %v538 = vrot.slane %v433, %v537
        %v540 = vmul.f32 %v538, %v533
        %v541 = vadd.f32 %v540, %v530
        %542 = vst.msk [vmem:[#allocation4] sm:$0xff] %vm420, %v541
        %543 = vst.msk [vmem:[#allocation2] sm:$0x1] %vm458, %v430
        // Predicated region
        $region49: #{tpu_custom_call.1} parent=31 // pred_check
          %p544 = pneg %p292
        $region50: #{tpu_custom_call.1} parent=31 // pred_check_branch
          %546 = sbr.rel (%p544) target = $region52
        $region51: #{tpu_custom_call.1} parent=31 // pred_region
          %v547 = vld [vmem:[#allocation3] sm:$0x1]
          %v548 = vrcp.pop %v547
          %v549 = vmul.f32 1.0, %v548
          %v550 = vld [vmem:[#allocation4] sm:$0xff]
          %v552 = vlaneseq
          %v553 = vshrl.u32 %v552, 7
          %v554 = vsub.s32 0, %v553
          %v555 = vrot.slane %v549, %v554
          %v557 = vmul.f32 %v550, %v555
          %558 = vst.msk [vmem:[%s291] sm:$0xff] %vm420, %v557
        $region52: #{tpu_custom_call.1} parent=31 // pred_fallthru
          _
        %s559 = sand.u32 %s136, 1
        %s560 = scalar_lea.sflag [#allocation7], %s559
        %s561 = sand.u32 %s136, 1
        %s562 = smul.addr %s561, 8
        %s563 = scalar_lea.vmem [#allocation11], %s562
        // Predicated region
        $region53: #{tpu_custom_call.1} parent=31 // pred_check
          %p564 = pneg %p146
        $region54: #{tpu_custom_call.1} parent=31 // pred_check_branch
          %566 = sbr.rel (%p564) target = $region56
        $region55: #{tpu_custom_call.1} parent=31 // pred_region
          %s568 = ssub.s32 128, 128
          %569 = vsyncadd %s560, %s568
          %s570 = sadd.s32 %s29, %s28
          %s571 = smul.addr %s570, 128
          %s572 = scalar_lea.hbm %s3, %s571
          %s574 = sshll.u32 %s563, 4
          %s575 = int_to_ptr.vmem [resolvable:$true] %s574
          %577 = dma.vmem_to_hbm [thread:$0]  %s575, 128, %s572, %s560
        $region56: #{tpu_custom_call.1} parent=31 // pred_fallthru
          _
      $region32: #{tpu_custom_call.1} parent=5 // pred_fallthru
        _
      %p578 = scmp.le.s32.totalorder 2, %s18
      // Predicated region
      $region57: #{tpu_custom_call.1} parent=5 // pred_check
        %p579 = pneg %p578
      $region58: #{tpu_custom_call.1} parent=5 // pred_check_branch
        %581 = sbr.rel (%p579) target = $region60
      $region59: #{tpu_custom_call.1} parent=5 // pred_region
        %s582 = ssub.s32 %s18, 2
        // Predicated region
        $region61: #{tpu_custom_call.1} parent=59 // pred_check
          %p583 = pneg %p152
        $region62: #{tpu_custom_call.1} parent=59 // pred_check_branch
          %585 = sbr.rel (%p583) target = $region64
        $region63: #{tpu_custom_call.1} parent=59 // pred_region
          %s586 = sand.u32 %s137, 1
          %s587 = scalar_lea.sflag [#allocation7], %s586
          %s588 = sand.u32 %s137, 1
          %s589 = smul.addr %s588, 8
          %s590 = scalar_lea.vmem [#allocation11], %s589
          %591 = dma.done %s587, 128
        $region64: #{tpu_custom_call.1} parent=59 // pred_fallthru
          _
      $region60: #{tpu_custom_call.1} parent=5 // pred_fallthru
        _
    $region6: #{tpu_custom_call.1} parent=1 // loop_footer
      %s22 = sadd.s32 1, %s18
    $region7: #{tpu_custom_call.1} parent=1 // loop_footer_branch
      %17 = sbr.rel target = $region3
    $region8: #{tpu_custom_call.1} parent=1 // loop_exit
      _
    %592 = vsyncpa [#allocation6], 1
    %s593 = scalar_lea.sflag [#allocation6], 1
    %594 = vsyncpa %s593, 1
    %595 = vsyncpa [#allocation9], 1
    %s596 = scalar_lea.sflag [#allocation9], 1
    %597 = vsyncpa %s596, 1
    %598 = vsyncpa [#allocation7], 1
    %s599 = scalar_lea.sflag [#allocation7], 1
    %600 = vsyncpa %s599, 1

</llo_original>
